<compile_context>
chip_gen: v7x
topology: tpu7x:2x2x1
jax: 0.10.0
libtpu: 0.0.40
codegen_flags: <defaults>
</compile_context>

<pallas_src>
import functools
import math

import numpy as np
import jax
import jax.numpy as jnp
from jax import lax
from jax.experimental import pallas as pl
from jax.experimental.pallas import tpu as pltpu

_LANE = 128
_SUBCHUNK = 512            # rows per in-kernel accumulation chunk (bounds temporaries)


def _cdiv(a, b):
    return -(-a // b)


@functools.lru_cache(maxsize=1)
def _chip_config():
    """Generation-aware tuning knobs (conservative fallbacks if undetectable)."""
    kind = ""
    try:
        dev = jax.devices()[0]
        if getattr(dev, "platform", "") == "tpu":
            kind = str(getattr(dev, "device_kind", "")).lower()
    except Exception:
        kind = ""
    vmem_cap = None
    try:
        vmem_cap = int(pltpu.get_tpu_info().vmem_capacity_bytes)
    except Exception:
        vmem_cap = None
    is_v7 = "v7" in kind
    if vmem_cap is None:
        # v5e/v6e have 128 MiB VMEM per core; v7x 64 MiB/TC; unknown -> conservative.
        vmem_cap = (128 if (kind and not is_v7) else 64) * 1024 * 1024
    if vmem_cap >= 96 * 1024 * 1024:
        # v5e / v6e: plenty of VMEM -> big blocks, fewer grid steps.
        input_budget = 48 * 1024 * 1024
        vmem_limit = 80 * 1024 * 1024
        block_rows = 8192
    else:
        # v7x (64 MiB per TC) or unknown: leave headroom for temporaries.
        input_budget = 24 * 1024 * 1024
        vmem_limit = 48 * 1024 * 1024
        block_rows = 4096
    return dict(
        num_partials=2 if is_v7 else 1,        # 2 TensorCores per chip on v7x only
        input_budget=input_budget,
        vmem_limit=vmem_limit,
        block_rows=block_rows,
        bf16_native=("v6" in kind) or is_v7,   # bf16 VALU exists on v6e / v7x
    )


def _make_kernel(alpha, gamma, beta, *, has_weights, rows, br, sc, steps,
                 need_mask, bf16_diff):
    # Fold balanced-L1 coefficients at trace time.
    b = math.e ** (gamma / alpha) - 1.0
    c1 = alpha / b               # note c1 * b == alpha
    k = b / beta                 # log argument scale (b*d/beta + 1 == k*d + 1)
    c2 = gamma / b - alpha * beta
    n_sub = br // sc

    def chunk_loss(p, t, w):
        if bf16_diff and p.dtype == jnp.bfloat16 and t.dtype == jnp.bfloat16:
            diff = jnp.abs(p - t).astype(jnp.float32)   # bf16 sub/abs on v6e/v7x VALU
        else:
            diff = jnp.abs(p.astype(jnp.float32) - t.astype(jnp.float32))
        log_term = jnp.log(k * diff + 1.0)              # EUP slot
        # alpha/b*(b*d+1)*log(k*d+1) - alpha*d  ==  alpha*d*(L-1) + c1*L
        small = alpha * diff * (log_term - 1.0) + c1 * log_term
        large = gamma * diff + c2
        loss = jnp.where(diff < beta, small, large)
        if w is not None:
            loss = loss * w.astype(jnp.float32)
        return loss

    def kernel(*refs):
        refs = list(refs)
        pred_ref = refs.pop(0)
        tgt_ref = refs.pop(0)
        w_ref = refs.pop(0) if has_weights else None
        (out_ref,) = refs                  # (1, 8, 128) f32 resident accumulator

        c = pl.program_id(0)               # TensorCore partial ("parallel")
        i = pl.program_id(1)               # reduction step ("arbitrary")

        @pl.when(i == 0)
        def _init():
            out_ref[...] = jnp.zeros_like(out_ref)

        row_blk = (c * steps + i) * br     # logical first row of this block

        def block_sum(apply_mask):
            def body(j, acc):
                r0 = j * sc
                if not isinstance(r0, int):
                    r0 = pl.multiple_of(r0, sc)
                p = pred_ref[pl.ds(r0, sc), :]
                t = tgt_ref[pl.ds(r0, sc), :]
                w = w_ref[pl.ds(r0, sc), :] if has_weights else None
                loss = chunk_loss(p, t, w)
                if apply_mask:
                    rid = lax.broadcasted_iota(jnp.int32, (sc, _LANE), 0)
                    # select-then-add: OOB/garbage rows never touch the accumulator
                    loss = jnp.where((row_blk + r0 + rid) < rows, loss, 0.0)
                return acc + loss.reshape(-1, 8, _LANE).sum(axis=0)

            init = jnp.zeros((8, _LANE), jnp.float32)
            if n_sub == 1:
                return body(0, init)
            if n_sub <= 8:
                acc = init
                for j in range(n_sub):     # static offsets, fully unrolled
                    acc = body(j, acc)
                return acc
            return lax.fori_loop(0, n_sub, body, init)

        if need_mask:
            @pl.when(row_blk + br <= rows)
            def _full():
                out_ref[0] += block_sum(False)

            @pl.when(row_blk + br > rows)
            def _partial():
                out_ref[0] += block_sum(True)
        else:
            out_ref[0] += block_sum(False)

    return kernel


def balanced_l1_loss(pred, target, weights=None, *,
                     alpha: float = 0.5, gamma: float = 1.5, beta: float = 0.11,
                     block_rows: int = None):
    """Matches BalancedL1Loss.forward: mean() if weights is None else
    (loss * weights).sum(). Returns a float32 scalar."""
    cfg = _chip_config()
    if block_rows is None:
        block_rows = cfg["block_rows"]

    pred = jnp.asarray(pred)
    target = jnp.asarray(target)
    assert pred.shape == target.shape
    if weights is not None:
        weights = jnp.asarray(weights)
        assert weights.shape == pred.shape
    n = int(np.prod(pred.shape))
    assert n > 0

    def prep(x):
        # Keep f32 / bf16 as-is (cast inside the kernel); promote anything else.
        if x.dtype not in (jnp.float32, jnp.bfloat16):
            x = x.astype(jnp.float32)
        return x.reshape(-1)

    flats = [prep(pred), prep(target)]
    if weights is not None:
        flats.append(prep(weights))
    has_weights = weights is not None

    # Lane-dense (rows, 128) view. Zero-copy whenever n is lane-aligned; otherwise
    # zero-pad (zero pred/target/weight contributes exactly 0 loss, no mask needed).
    # TODO(synk): for lane-unaligned n the jnp.pad is one full HBM copy per input;
    # a manual-DMA path (memory_space=pl.ANY) could stream the flat arrays directly.
    if n % _LANE == 0 and n >= 8 * _LANE:
        mains = [f.reshape(n // _LANE, _LANE) for f in flats]
    else:
        n_pad = max(_cdiv(n, _LANE), 8) * _LANE
        mains = [jnp.pad(f, (0, n_pad - n)).reshape(n_pad // _LANE, _LANE)
                 for f in flats]
    rows = mains[0].shape[0]

    # Block size: as large as possible within a generation-aware VMEM budget
    # (inputs x 3 pipeline buffers), shaped as a multiple of the sub-chunk.
    itemsize = max(int(x.dtype.itemsize) for x in mains)
    max_br = cfg["input_budget"] // (3 * len(mains) * _LANE * itemsize)
    br = min(block_rows, rows, max(max_br, 8))
    if br >= _SUBCHUNK:
        br -= br % _SUBCHUNK
        sc = _SUBCHUNK
    else:
        br = max(8, br - br % 8)
        sc = br

    num_partials = cfg["num_partials"]
    n_blocks = _cdiv(rows, br)
    steps = _cdiv(n_blocks, num_partials)
    need_mask = num_partials * steps * br > rows

    kernel = _make_kernel(alpha, gamma, beta, has_weights=has_weights,
                          rows=rows, br=br, sc=sc, steps=steps,
                          need_mask=need_mask, bf16_diff=cfg["bf16_native"])

    if num_partials * steps == n_blocks:
        def main_idx(c, i):
            return (c * steps + i, 0)
    else:
        last_block = n_blocks - 1

        def main_idx(c, i):
            # duplicate trailing steps re-read the last block but are fully masked
            return (jnp.minimum(c * steps + i, last_block), 0)

    plain_specs = [pl.BlockSpec((br, _LANE), main_idx)] * len(mains)
    buffered_specs = None
    if hasattr(pl, "Buffered"):
        try:
            buffered_specs = [pl.BlockSpec((br, _LANE), main_idx,
                                           pipeline_mode=pl.Buffered(3))] * len(mains)
        except Exception:
            buffered_specs = None

    out_spec = pl.BlockSpec((1, 8, _LANE), lambda c, i: (c, 0, 0))

    def run(in_specs):
        return pl.pallas_call(
            kernel,
            out_shape=jax.ShapeDtypeStruct((num_partials, 8, _LANE), jnp.float32),
            grid_spec=pltpu.PrefetchScalarGridSpec(
                num_scalar_prefetch=0,
                grid=(num_partials, steps),
                in_specs=in_specs,
                out_specs=out_spec,
            ),
            compiler_params=pltpu.CompilerParams(
                # TODO(synk): on v7x verify "parallel" actually shards across both
                # TensorCores (else switch to pltpu.CORE_PARALLEL / pl.core_map).
                dimension_semantics=("parallel", "arbitrary"),
                vmem_limit_bytes=cfg["vmem_limit"],
            ),
        )(*mains)

    if buffered_specs is not None:
        try:
            out = run(buffered_specs)
        except Exception:       # older jax: fall back to default double buffering
            out = run(plain_specs)
    else:
        out = run(plain_specs)

    total = jnp.sum(out)        # single final cross-lane reduce, outside the kernel
    if not has_weights:
        total = total / np.float32(n)
    return total


def _reference(pred, target, weights=None, alpha=0.5, gamma=1.5, beta=0.11):
    pred = pred.astype(jnp.float32)
    target = target.astype(jnp.float32)
    diff = jnp.abs(pred - target)
    b = math.e ** (gamma / alpha) - 1.0
    loss = jnp.where(
        diff < beta,
        alpha / b * (b * diff + 1.0) * jnp.log(b * diff / beta + 1.0)
        - alpha * diff,
        gamma * diff + gamma / b - alpha * beta,
    )
    if weights is None:
        return loss.mean()
    return (loss * weights.astype(jnp.float32)).sum()


if __name__ == "__main__":
    key = jax.random.PRNGKey(0)
    k1, k2, k3 = jax.random.split(key, 3)

    # Small NCHW regression-style inputs (lane-aligned zero-copy path: 2048 elems).
    shape = (2, 4, 16, 16)
    pred = jax.random.normal(k1, shape, dtype=jnp.float32) * 0.2
    target = jax.random.normal(k2, shape, dtype=jnp.float32) * 0.2
    weights = jax.random.uniform(k3, shape, dtype=jnp.float32)

    out_mean = jax.block_until_ready(balanced_l1_loss(pred, target))
    ref_mean = _reference(pred, target)
    assert jnp.allclose(out_mean, ref_mean, rtol=1e-5, atol=1e-6), (out_mean, ref_mean)

    out_wsum = jax.block_until_ready(balanced_l1_loss(pred, target, weights))
    ref_wsum = _reference(pred, target, weights)
    assert jnp.allclose(out_wsum, ref_wsum, rtol=1e-5, atol=1e-5), (out_wsum, ref_wsum)

    # bf16 inputs stay bf16 on the wire; diff may be computed in bf16 on v6e/v7x.
    pb, tb = pred.astype(jnp.bfloat16), target.astype(jnp.bfloat16)
    out_bf16 = jax.block_until_ready(balanced_l1_loss(pb, tb))
    ref_bf16 = _reference(pb, tb)
    assert jnp.allclose(out_bf16, ref_bf16, rtol=2e-3, atol=1e-4), (out_bf16, ref_bf16)

    # Lane-unaligned size -> exercises the zero-padded wrapper path.
    k4, k5, k6 = jax.random.split(jax.random.PRNGKey(1), 3)
    shape2 = (2, 3, 17, 31)            # 3162 elements
    p2 = jax.random.normal(k4, shape2, dtype=jnp.float32) * 0.2
    t2 = jax.random.normal(k5, shape2, dtype=jnp.float32) * 0.2
    w2 = jax.random.uniform(k6, shape2, dtype=jnp.float32)
    out2 = jax.block_until_ready(balanced_l1_loss(p2, t2, w2))
    ref2 = _reference(p2, t2, w2)
    assert jnp.allclose(out2, ref2, rtol=1e-5, atol=1e-5), (out2, ref2)

    # Tiny input (< one (8,128) tile) -> padded-tile path.
    k7, k8 = jax.random.split(jax.random.PRNGKey(2), 2)
    shape3 = (2, 4, 5, 5)              # 200 elements
    p3 = jax.random.normal(k7, shape3, dtype=jnp.float32) * 0.2
    t3 = jax.random.normal(k8, shape3, dtype=jnp.float32) * 0.2
    out3 = jax.block_until_ready(balanced_l1_loss(p3, t3))
    ref3 = _reference(p3, t3)
    assert jnp.allclose(out3, ref3, rtol=1e-5, atol=1e-6), (out3, ref3)

    # Block count not dividing rows -> exercises the masked last block.
    k9, k10 = jax.random.split(jax.random.PRNGKey(3), 2)
    shape4 = (1, 8, 64, 64)            # 32768 elements = 256 rows
    p4 = jax.random.normal(k9, shape4, dtype=jnp.float32) * 0.2
    t4 = jax.random.normal(k10, shape4, dtype=jnp.float32) * 0.2
    out4 = jax.block_until_ready(balanced_l1_loss(p4, t4, block_rows=48))
    ref4 = _reference(p4, t4)
    assert jnp.allclose(out4, ref4, rtol=1e-5, atol=1e-6), (out4, ref4)

    # Larger input -> exercises the unrolled sub-chunk accumulation (1 < n_sub <= 8).
    k11, k12 = jax.random.split(jax.random.PRNGKey(4), 2)
    shape5 = (8, 16, 64, 64)           # 524288 elements = 4096 rows
    p5 = jax.random.normal(k11, shape5, dtype=jnp.float32) * 0.2
    t5 = jax.random.normal(k12, shape5, dtype=jnp.float32) * 0.2
    out5 = jax.block_until_ready(balanced_l1_loss(p5, t5, block_rows=4096))
    ref5 = _reference(p5, t5)
    assert jnp.allclose(out5, ref5, rtol=1e-4, atol=1e-6), (out5, ref5)

    # Bigger block -> exercises the lax.fori_loop sub-chunk path (n_sub > 8).
    k13, k14 = jax.random.split(jax.random.PRNGKey(5), 2)
    shape6 = (1, 16, 256, 256)         # 1048576 elements = 8192 rows
    p6 = jax.random.normal(k13, shape6, dtype=jnp.float32) * 0.2
    t6 = jax.random.normal(k14, shape6, dtype=jnp.float32) * 0.2
    out6 = jax.block_until_ready(balanced_l1_loss(p6, t6, block_rows=8192))
    ref6 = _reference(p6, t6)
    assert jnp.allclose(out6, ref6, rtol=1e-4, atol=1e-6), (out6, ref6)

    print("KERNEL_OK")
</pallas_src>

<mosaic_0001>
module attributes {stable_mosaic.version = 11 : i64} {
  func.func @kernel(%arg0: i32, %arg1: i32, %arg2: memref<16x128xf32, #tpu.memory_space<vmem>>, %arg3: memref<16x128xf32, #tpu.memory_space<vmem>>, %arg4: memref<1x8x128xf32, #tpu.memory_space<vmem>>) attributes {dimension_semantics = [#tpu.dimension_semantics<parallel>, #tpu.dimension_semantics<arbitrary>], iteration_bounds = array<i64: 1, 1>, scalar_prefetch = 0 : i64, scratch_operands = 0 : i64, tpu.core_type = #tpu.core_type<tc>, window_params = [{transform_indices = @transform_0, window_bounds = array<i64: 16, 128>}, {transform_indices = @transform_1, window_bounds = array<i64: 16, 128>}, {transform_indices = @transform_2, window_bounds = array<i64: 1, 8, 128>}]} {
    %c0_i32 = arith.constant 0 : i32
    %0 = arith.cmpi eq, %arg1, %c0_i32 : i32
    %1 = arith.extui %0 : i1 to i32
    %c0_i32_0 = arith.constant 0 : i32
    %2 = arith.cmpi ne, %1, %c0_i32_0 : i32
    scf.if %2 {
      %cst_19 = arith.constant 0.000000e+00 : f32
      %37 = vector.broadcast %cst_19 : f32 to vector<1x8x128xf32>
      %c0_20 = arith.constant 0 : index
      %c0_21 = arith.constant 0 : index
      %c0_22 = arith.constant 0 : index
      %38 = vector.load %arg4[%c0_20, %c0_21, %c0_22] : memref<1x8x128xf32, #tpu.memory_space<vmem>>, vector<1x8x128xf32>
      tpu.vector_store %arg4[%c0_20, %c0_21, %c0_22], %37 {strides = array<i32>} : memref<1x8x128xf32, #tpu.memory_space<vmem>>, vector<1x8x128xf32>,
    } else {
    }
    %c0 = arith.constant 0 : index
    %c0_1 = arith.constant 0 : index
    %c0_2 = arith.constant 0 : index
    %3 = vector.load %arg4[%c0, %c0_1, %c0_2] : memref<1x8x128xf32, #tpu.memory_space<vmem>>, vector<1x8x128xf32>
    %4 = vector.shape_cast %3 : vector<1x8x128xf32> to vector<8x128xf32>
    %cst = arith.constant 0.000000e+00 : f32
    %5 = vector.broadcast %cst : f32 to vector<8x128xf32>
    %c0_3 = arith.constant 0 : index
    %c0_4 = arith.constant 0 : index
    %6 = vector.load %arg2[%c0_3, %c0_4] : memref<16x128xf32, #tpu.memory_space<vmem>>, vector<16x128xf32>
    %c0_5 = arith.constant 0 : index
    %c0_6 = arith.constant 0 : index
    %7 = vector.load %arg3[%c0_5, %c0_6] : memref<16x128xf32, #tpu.memory_space<vmem>>, vector<16x128xf32>
    %8 = arith.subf %6, %7 : vector<16x128xf32>
    %9 = math.absf %8 : vector<16x128xf32>
    %cst_7 = arith.constant 173.504883 : f32
    %10 = vector.broadcast %cst_7 : f32 to vector<16x128xf32>
    %11 = arith.mulf %10, %9 : vector<16x128xf32>
    %cst_8 = arith.constant 1.000000e+00 : f32
    %12 = vector.broadcast %cst_8 : f32 to vector<16x128xf32>
    %13 = arith.addf %11, %12 : vector<16x128xf32>
    %14 = math.log %13 : vector<16x128xf32>
    %cst_9 = arith.constant 5.000000e-01 : f32
    %15 = vector.broadcast %cst_9 : f32 to vector<16x128xf32>
    %16 = arith.mulf %15, %9 : vector<16x128xf32>
    %cst_10 = arith.constant 1.000000e+00 : f32
    %17 = vector.broadcast %cst_10 : f32 to vector<16x128xf32>
    %18 = arith.subf %14, %17 : vector<16x128xf32>
    %19 = arith.mulf %16, %18 : vector<16x128xf32>
    %cst_11 = arith.constant 0.0261978488 : f32
    %20 = vector.broadcast %cst_11 : f32 to vector<16x128xf32>
    %21 = arith.mulf %20, %14 : vector<16x128xf32>
    %22 = arith.addf %19, %21 : vector<16x128xf32>
    %cst_12 = arith.constant 1.500000e+00 : f32
    %23 = vector.broadcast %cst_12 : f32 to vector<16x128xf32>
    %24 = arith.mulf %23, %9 : vector<16x128xf32>
    %cst_13 = arith.constant 0.023593545 : f32
    %25 = vector.broadcast %cst_13 : f32 to vector<16x128xf32>
    %26 = arith.addf %24, %25 : vector<16x128xf32>
    %cst_14 = arith.constant 1.100000e-01 : f32
    %27 = vector.broadcast %cst_14 : f32 to vector<16x128xf32>
    %28 = arith.cmpf olt, %9, %27 : vector<16x128xf32>
    %29 = arith.select %28, %22, %26 : vector<16x128xi1>, vector<16x128xf32>
    %30 = vector.shape_cast %29 : vector<16x128xf32> to vector<2x8x128xf32>
    %cst_15 = arith.constant dense<0.000000e+00> : vector<8x128xf32>
    %31 = vector.multi_reduction <add>, %30, %cst_15 [0] : vector<2x8x128xf32> to vector<8x128xf32>
    %32 = arith.addf %5, %31 : vector<8x128xf32>
    %33 = arith.addf %4, %32 : vector<8x128xf32>
    %c0_16 = arith.constant 0 : index
    %c0_17 = arith.constant 0 : index
    %c0_18 = arith.constant 0 : index
    %34 = vector.load %arg4[%c0_16, %c0_17, %c0_18] : memref<1x8x128xf32, #tpu.memory_space<vmem>>, vector<1x8x128xf32>
    %35 = vector.shape_cast %34 : vector<1x8x128xf32> to vector<8x128xf32>
    %36 = vector.shape_cast %33 : vector<8x128xf32> to vector<1x8x128xf32>
    tpu.vector_store %arg4[%c0_16, %c0_17, %c0_18], %36 {strides = array<i32>} : memref<1x8x128xf32, #tpu.memory_space<vmem>>, vector<1x8x128xf32>,
    return
  }
  func.func @transform_0(%arg0: i32, %arg1: i32) -> (i32, i32) {
    %c1_i32 = arith.constant 1 : i32
    %0 = arith.muli %arg0, %c1_i32 : i32
    %1 = arith.addi %0, %arg1 : i32
    %c0_i32 = arith.constant 0 : i32
    %c0_i32_0 = arith.constant 0 : i32
    return %1, %c0_i32 : i32, i32
  }
  func.func @transform_1(%arg0: i32, %arg1: i32) -> (i32, i32) {
    %c1_i32 = arith.constant 1 : i32
    %0 = arith.muli %arg0, %c1_i32 : i32
    %1 = arith.addi %0, %arg1 : i32
    %c0_i32 = arith.constant 0 : i32
    %c0_i32_0 = arith.constant 0 : i32
    return %1, %c0_i32 : i32, i32
  }
  func.func @transform_2(%arg0: i32, %arg1: i32) -> (i32, i32, i32) {
    %c0_i32 = arith.constant 0 : i32
    %c0_i32_0 = arith.constant 0 : i32
    %c0_i32_1 = arith.constant 0 : i32
    return %arg0, %c0_i32, %c0_i32_0 : i32, i32, i32
  }
}

</mosaic_0001>

<llo_original>
// kernel: tpu_custom_call.1
$region0: #{tpu_custom_call.1}
  #allocation0 [shape = 'u32[]', space=smem, size = 0x4, offset = 0x4, fixed_abs, tag = 'smem constant byte address 0x4 - core index']
  #allocation1 [shape = 'u32[144,128]{1,0:T(1,128)}', space=vmem, size = 0x12000, scoped, tag = 'internal scratch']
  %s0 = inlined_call_operand.hbm [shape: f32[16,128], index: 0, kind: input, shape index: {}]
  %s1 = inlined_call_operand.hbm [shape: f32[16,128], index: 1, kind: input, shape index: {}]
  %s2 = inlined_call_operand.hbm [shape: f32[1,8,128], index: 2, kind: output, shape index: {}]
  %s3 = sld [smem:[#allocation0]]
  $region30: #{tpu_custom_call.1} parent=0
    _
  %s5 = ssub.s32 1, %s3
  %s6 = scalar_select 0, %s5, %s3
  $region1: #{tpu_custom_call.1} parent=0
    #allocation2 [shape = 'u8[8192]{0}', space=vmem, size = 0x2000, scoped, tag = 'input window, operand 0, single buffered']
    #allocation3 [shape = 's32[1]{0}', space=sflag, size = 0x4, scoped, tag = 'scoped memory for tpu_custom_call.1']
    #allocation4 [shape = 's32[1]{0}', space=sflag, size = 0x4, scoped, tag = 'scoped memory for tpu_custom_call.1']
    #allocation5 [shape = 'u8[8192]{0}', space=vmem, size = 0x2000, scoped, tag = 'input window, operand 1, single buffered']
    #allocation6 [shape = 's32[1]{0}', space=sflag, size = 0x4, scoped, tag = 'scoped memory for tpu_custom_call.1']
    #allocation7 [shape = 'u8[4096]{0}', space=vmem, size = 0x1000, scoped, tag = 'output window, operand 0, single buffered']
    %7 = vsyncpa [#allocation3], 0
    %8 = vsyncpa [#allocation6], 0
    %9 = vsyncpa [#allocation4], 0
    // Predicated region
    $region2: #{tpu_custom_call.1} parent=1 // pred_check
      _
    $region3: #{tpu_custom_call.1} parent=1 // pred_check_branch
      %11 = sbr.rel (0) target = $region5
    $region4: #{tpu_custom_call.1} parent=1 // pred_region
      %s12 = sadd.s32 0, 0
      %s13 = smul.u32 2, %s12
      %s15 = ssub.s32 256, 256
      %16 = vsyncadd [#allocation3], %s15
      %s17 = smul.addr %s13, 128
      %s18 = scalar_lea.hbm %s0, %s17
      %s19 = sshll.u32 [#allocation2], 4
      %s20 = int_to_ptr.vmem [resolvable:$true] %s19
      %25 = dma.hbm_to_vmem [thread:$0]  %s18, 256, %s20, [#allocation3], 128, 128, 8
    $region5: #{tpu_custom_call.1} parent=1 // pred_fallthru
      _
    // Predicated region
    $region6: #{tpu_custom_call.1} parent=1 // pred_check
      _
    $region7: #{tpu_custom_call.1} parent=1 // pred_check_branch
      %27 = sbr.rel (0) target = $region9
    $region8: #{tpu_custom_call.1} parent=1 // pred_region
      %s28 = sadd.s32 0, 0
      %s29 = smul.u32 2, %s28
      %s31 = ssub.s32 256, 256
      %32 = vsyncadd [#allocation6], %s31
      %s33 = smul.addr %s29, 128
      %s34 = scalar_lea.hbm %s1, %s33
      %s35 = sshll.u32 [#allocation5], 4
      %s36 = int_to_ptr.vmem [resolvable:$true] %s35
      %41 = dma.hbm_to_vmem [thread:$0]  %s34, 256, %s36, [#allocation6], 128, 128, 8
    $region9: #{tpu_custom_call.1} parent=1 // pred_fallthru
      _
    // Predicated region
    $region10: #{tpu_custom_call.1} parent=1 // pred_check
      _
    $region11: #{tpu_custom_call.1} parent=1 // pred_check_branch
      %43 = sbr.rel (0) target = $region13
    $region12: #{tpu_custom_call.1} parent=1 // pred_region
      %44 = dma.done [#allocation3], 256
    $region13: #{tpu_custom_call.1} parent=1 // pred_fallthru
      _
    // Predicated region
    $region14: #{tpu_custom_call.1} parent=1 // pred_check
      _
    $region15: #{tpu_custom_call.1} parent=1 // pred_check_branch
      %46 = sbr.rel (0) target = $region17
    $region16: #{tpu_custom_call.1} parent=1 // pred_region
      %47 = dma.done [#allocation6], 256
    $region17: #{tpu_custom_call.1} parent=1 // pred_fallthru
      _
    %s48 = sadd.s32 0, 0
    %s49 = smul.u32 2, %s48
    %s50 = sadd.s32 0, 0
    %s51 = smul.u32 2, %s50
    %p52 = scmp.eq.s32.totalorder 0, 0
    // Predicated region
    $region18: #{tpu_custom_call.1} parent=1 // pred_check
      %p53 = pneg %p52
    $region19: #{tpu_custom_call.1} parent=1 // pred_check_branch
      %55 = sbr.rel (%p53) target = $region21
    $region20: #{tpu_custom_call.1} parent=1 // pred_region
      %56 = vst [vmem:[#allocation7] sm:$0xff] 0.0
    $region21: #{tpu_custom_call.1} parent=1 // pred_fallthru
      _
    %v57 = vld [vmem:[#allocation7] sm:$0xff]
    %v58 = vld [vmem:[#allocation2] sm:$0xff]
    %v59 = vld [vmem:[#allocation2 + $0x8] sm:$0xff]
    %v60 = vld [vmem:[#allocation5] sm:$0xff]
    %v61 = vld [vmem:[#allocation5 + $0x8] sm:$0xff]
    %v62 = vsub.f32 %v58, %v60
    %v63 = vsub.f32 %v59, %v61
    %v64 = vand.u32 2147483647, %v62
    %v65 = vand.u32 2147483647, %v63
    %v66 = vmul.f32 %v64, 173.50488
    %v67 = vmul.f32 %v65, 173.50488
    %v68 = vadd.f32 %v66, 1.0
    %v69 = vadd.f32 %v67, 1.0
    %v70 = vlog2.pop %v68
    %v71 = vmul.f32 %v70, 0.6931472
    %v72 = vlog2.pop %v69
    %v73 = vmul.f32 %v72, 0.6931472
    %v74 = vmul.f32 %v64, 0.5
    %v75 = vmul.f32 %v65, 0.5
    %v76 = vsub.f32 %v71, 1.0
    %v77 = vsub.f32 %v73, 1.0
    %v78 = vmul.f32 %v74, %v76
    %v79 = vmul.f32 %v75, %v77
    %v80 = vmul.f32 %v71, 0.026197849
    %v81 = vmul.f32 %v73, 0.026197849
    %v82 = vadd.f32 %v78, %v80
    %v83 = vadd.f32 %v79, %v81
    %v84 = vmul.f32 %v64, 1.5
    %v85 = vmul.f32 %v65, 1.5
    %v86 = vadd.f32 %v84, 0.023593545
    %v87 = vadd.f32 %v85, 0.023593545
    %vm88 = vcmp.lt.f32.partialorder %v64, 0.11
    %vm89 = vcmp.lt.f32.partialorder %v65, 0.11
    %v90 = vsel %vm88, %v82, %v86
    %v91 = vsel %vm89, %v83, %v87
    %v92 = vadd.f32 %v90, %v91
    %v93 = vadd.f32 %v92, 0.0
    %v94 = vadd.f32 %v57, %v93
    %95 = vst [vmem:[#allocation7] sm:$0xff] %v94
    // Predicated region
    $region22: #{tpu_custom_call.1} parent=1 // pred_check
      _
    $region23: #{tpu_custom_call.1} parent=1 // pred_check_branch
      %97 = sbr.rel (0) target = $region25
    $region24: #{tpu_custom_call.1} parent=1 // pred_region
      %s99 = ssub.s32 128, 128
      %100 = vsyncadd [#allocation4], %s99
      %s102 = sshll.u32 [#allocation7], 4
      %s103 = int_to_ptr.vmem [resolvable:$true] %s102
      %105 = dma.vmem_to_hbm [thread:$0]  %s103, 128, %s2, [#allocation4]
    $region25: #{tpu_custom_call.1} parent=1 // pred_fallthru
      _
    // Predicated region
    $region26: #{tpu_custom_call.1} parent=1 // pred_check
      _
    $region27: #{tpu_custom_call.1} parent=1 // pred_check_branch
      %107 = sbr.rel (0) target = $region29
    $region28: #{tpu_custom_call.1} parent=1 // pred_region
      %108 = dma.done [#allocation4], 128
    $region29: #{tpu_custom_call.1} parent=1 // pred_fallthru
      _
    %109 = vsyncpa [#allocation3], 1
    %110 = vsyncpa [#allocation6], 1
    %111 = vsyncpa [#allocation4], 1

</llo_original>
